<compile_context>
chip_gen: v7x
topology: tpu7x:2x2x1
jax: 0.10.0
libtpu: 0.0.40
codegen_flags: <defaults>
</compile_context>

<pallas_src>
import functools

import jax
import jax.numpy as jnp
from jax.experimental import pallas as pl
from jax.experimental.pallas import tpu as pltpu

_NEG_LARGE = float(jnp.finfo(jnp.float32).min)


def _round_up(v, m):
    return (v + m - 1) // m * m


def _choose_hw_tile(C, hw_pad, itemsize, target_bytes):
    """Largest lane-aligned spatial tile that divides hw_pad and fits the budget."""
    q = hw_pad // 128
    best = 1
    for d in range(1, q + 1):
        if q % d == 0 and 128 * d * C * itemsize <= target_bytes:
            best = d
    return 128 * best


def _mlp_mask(avg, mx, w1, b1, w2, b2):
    """sigmoid(fus(avg) + fus(mx)) on (C, 1) column vectors, all math in f32.

    fus(v) = w2 @ relu(w1 @ v + b1) + b2, therefore
      fus(avg) + fus(mx) = w2 @ (relu(w1@avg + b1) + relu(w1@mx + b1)) + 2*b2
    which shares the second-layer matmul (and all weight tiles are already
    resident in VMEM).  Stacking avg/max into a single (C, 2) operand to also
    share the first layer was deliberately skipped: a width-1 lane concatenate
    is a lowering risk and the MLP cost is noise next to the HBM traffic.
    The 1/HW of the mean is folded into a scalar multiply by the caller.
    """
    h_a = jnp.maximum(jnp.dot(w1, avg, preferred_element_type=jnp.float32) + b1, 0.0)
    h_m = jnp.maximum(jnp.dot(w1, mx, preferred_element_type=jnp.float32) + b1, 0.0)
    y = jnp.dot(w2, h_a + h_m, preferred_element_type=jnp.float32) + 2.0 * b2
    return jax.nn.sigmoid(y)


# ----------------------------------------------------------------------------
# Path A: single-pass fused kernel (small slabs only).
# ----------------------------------------------------------------------------
def ca_fused_kernel(x_ref, w1_ref, b1_ref, w2_ref, b2_ref, o_ref, *, hw_valid, padded):
    # x_ref: (1, C, HWpad).  Only the tiny pooled vectors are upcast to f32;
    # the full slab is never upcast / duplicated in vregs.
    x = x_ref[0]                                                    # (C, HWpad)
    s = jnp.sum(x, axis=-1, keepdims=True).astype(jnp.float32)      # zeros pad -> sum ok
    if padded:
        pos = jax.lax.broadcasted_iota(jnp.int32, x.shape, 1)
        x = jnp.where(pos < hw_valid, x, jnp.asarray(_NEG_LARGE, x.dtype))
    mx = jnp.max(x, axis=-1, keepdims=True).astype(jnp.float32)
    avg = s * jnp.float32(1.0 / hw_valid)
    m = _mlp_mask(avg, mx, w1_ref[...], b1_ref[...], w2_ref[...], b2_ref[...])
    # Re-read the tile from VMEM for the scaled store instead of keeping the
    # whole slab live across the mask computation (reduces vreg spill pressure).
    o_ref[0] = x_ref[0] * m.astype(o_ref.dtype)


# ----------------------------------------------------------------------------
# Path B, pass 1: pooled stats over HW tiles + channel mask.
# ----------------------------------------------------------------------------
def ca_pool_mask_kernel(x_ref, w1_ref, b1_ref, w2_ref, b2_ref, mask_ref,
                        sum_ref, max_ref, *, hw_valid, thw, padded):
    k = pl.program_id(1)

    @pl.when(k == 0)
    def _init():
        sum_ref[...] = jnp.zeros_like(sum_ref)
        max_ref[...] = jnp.full_like(max_ref, _NEG_LARGE)

    x = x_ref[0]                                                    # (C, thw)
    # Per-tile partial reductions stay in the input dtype; cross-tile
    # accumulation is f32 in VMEM scratch.
    sum_ref[...] += jnp.sum(x, axis=-1, keepdims=True).astype(jnp.float32)
    if padded:  # keep the zero-padded tail lanes out of the max
        pos = k * thw + jax.lax.broadcasted_iota(jnp.int32, x.shape, 1)
        x = jnp.where(pos < hw_valid, x, jnp.asarray(_NEG_LARGE, x.dtype))
    max_ref[...] = jnp.maximum(
        max_ref[...], jnp.max(x, axis=-1, keepdims=True).astype(jnp.float32))

    @pl.when(k == pl.num_programs(1) - 1)
    def _finalize():
        avg = sum_ref[...] * jnp.float32(1.0 / hw_valid)            # fold 1/HW in
        m = _mlp_mask(avg, max_ref[...],
                      w1_ref[...], b1_ref[...], w2_ref[...], b2_ref[...])
        mask_ref[0] = m                                             # (C, 1) f32


# ----------------------------------------------------------------------------
# Path B, pass 2: broadcast-multiply (lane-dense, unmasked stores).
# ----------------------------------------------------------------------------
def ca_apply_kernel(x_ref, mask_ref, o_ref):
    # (1, C, 1) mask lane-broadcast over the (1, C, thw) tile; only the tiny
    # mask is cast, never the full slab.
    o_ref[...] = x_ref[...] * mask_ref[...].astype(o_ref.dtype)


# ----------------------------------------------------------------------------
# Wrapper
# ----------------------------------------------------------------------------
def ca_forward(x, w1, b1, w2, b2, *,
               single_pass_max_bytes=1 << 20,     # slab budget for Path A
               hw_tile_target_bytes=1 << 20,      # per-block budget for Path B
               vmem_limit_bytes=32 * 1024 * 1024):
    """Channel-attention forward.

    x : (N, C, H, W)
    w1: (C//2, C)   first 1x1 conv weight (squeezed), b1: (C//2,)
    w2: (C, C//2)   second 1x1 conv weight (squeezed), b2: (C,)
    """
    N, C, H, W = x.shape
    HW = H * W
    C2 = w1.shape[0]
    itemsize = jnp.dtype(x.dtype).itemsize

    hw_pad = _round_up(HW, 128)                   # lane-aligned spatial extent
    padded = hw_pad != HW
    xf = x.reshape(N, C, HW)
    if padded:
        xf = jnp.pad(xf, ((0, 0), (0, 0), (0, hw_pad - HW)))  # zeros: safe for sum

    # Biases as f32 columns; weights kept as provided (conv orientation).
    b1c = b1.reshape(C2, 1).astype(jnp.float32)
    b2c = b2.reshape(C, 1).astype(jnp.float32)
    # NOTE: the tiny (C2,C)/(C,1) weight & bias blocks are grid-invariant and
    # get padded to (8,128) VMEM tiles — negligible, counted once per core.

    slab_bytes = C * hw_pad * itemsize

    if slab_bytes <= single_pass_max_bytes:
        # ---- Path A: one read + one write per element -----------------------
        out = pl.pallas_call(
            functools.partial(ca_fused_kernel, hw_valid=HW, padded=padded),
            out_shape=jax.ShapeDtypeStruct((N, C, hw_pad), x.dtype),
            grid=(N,),
            in_specs=[
                pl.BlockSpec((1, C, hw_pad), lambda n: (n, 0, 0)),
                pl.BlockSpec((C2, C), lambda n: (0, 0)),
                pl.BlockSpec((C2, 1), lambda n: (0, 0)),
                pl.BlockSpec((C, C2), lambda n: (0, 0)),
                pl.BlockSpec((C, 1), lambda n: (0, 0)),
            ],
            out_specs=pl.BlockSpec((1, C, hw_pad), lambda n: (n, 0, 0)),
            compiler_params=pltpu.CompilerParams(
                dimension_semantics=("parallel",),
                vmem_limit_bytes=vmem_limit_bytes),
        )(xf, w1, b1c, w2, b2c)
    else:
        # ---- Path B: two-pass (pool/mask, then apply) ------------------------
        thw = _choose_hw_tile(C, hw_pad, itemsize, hw_tile_target_bytes)
        ntiles = hw_pad // thw

        mask = pl.pallas_call(
            functools.partial(ca_pool_mask_kernel,
                              hw_valid=HW, thw=thw, padded=padded),
            out_shape=jax.ShapeDtypeStruct((N, C, 1), jnp.float32),
            grid=(N, ntiles),
            in_specs=[
                pl.BlockSpec((1, C, thw), lambda n, k: (n, 0, k)),
                pl.BlockSpec((C2, C), lambda n, k: (0, 0)),
                pl.BlockSpec((C2, 1), lambda n, k: (0, 0)),
                pl.BlockSpec((C, C2), lambda n, k: (0, 0)),
                pl.BlockSpec((C, 1), lambda n, k: (0, 0)),
            ],
            out_specs=pl.BlockSpec((1, C, 1), lambda n, k: (n, 0, 0)),
            scratch_shapes=[pltpu.VMEM((C, 1), jnp.float32),   # running sum
                            pltpu.VMEM((C, 1), jnp.float32)],  # running max
            compiler_params=pltpu.CompilerParams(
                dimension_semantics=("parallel", "arbitrary"),
                vmem_limit_bytes=vmem_limit_bytes),
        )(xf, w1, b1c, w2, b2c)

        out = pl.pallas_call(
            ca_apply_kernel,
            out_shape=jax.ShapeDtypeStruct((N, C, hw_pad), x.dtype),
            grid=(N, ntiles),
            in_specs=[
                pl.BlockSpec((1, C, thw), lambda n, k: (n, 0, k)),
                pl.BlockSpec((1, C, 1), lambda n, k: (n, 0, 0)),
            ],
            out_specs=pl.BlockSpec((1, C, thw), lambda n, k: (n, 0, k)),
            compiler_params=pltpu.CompilerParams(
                dimension_semantics=("parallel", "parallel"),
                vmem_limit_bytes=vmem_limit_bytes),
        )(xf, mask)

    if padded:
        out = out[:, :, :HW]
    return out.reshape(N, C, H, W)


def ca_reference(x, w1, b1, w2, b2):
    avg = jnp.mean(x, axis=(2, 3))   # (N, C)
    mx = jnp.max(x, axis=(2, 3))     # (N, C)

    def fus(v):
        h = jnp.maximum(v @ w1.T + b1, 0.0)
        return h @ w2.T + b2

    mask = jax.nn.sigmoid(fus(avg) + fus(mx))
    return x * mask[:, :, None, None]


if __name__ == "__main__":
    def make_inputs(key, N, C, H, W):
        C2 = C // 2
        ks = jax.random.split(key, 5)
        x = jax.random.normal(ks[0], (N, C, H, W), dtype=jnp.float32)
        w1 = 0.1 * jax.random.normal(ks[1], (C2, C), dtype=jnp.float32)
        b1 = 0.1 * jax.random.normal(ks[2], (C2,), dtype=jnp.float32)
        w2 = 0.1 * jax.random.normal(ks[3], (C, C2), dtype=jnp.float32)
        b2 = 0.1 * jax.random.normal(ks[4], (C,), dtype=jnp.float32)
        return x, w1, b1, w2, b2

    key = jax.random.PRNGKey(0)
    k1, k2 = jax.random.split(key)

    # 1) Small, lane-aligned shape -> exercises the single-pass fused path.
    x, w1, b1, w2, b2 = make_inputs(k1, 2, 8, 16, 16)
    out = jax.block_until_ready(ca_forward(x, w1, b1, w2, b2))
    ref = ca_reference(x, w1, b1, w2, b2)
    assert out.shape == x.shape
    assert jnp.allclose(out, ref, atol=1e-5, rtol=1e-5)

    # 2) Non-lane-aligned spatial (12x12=144), forced down the two-pass tiled
    #    path with a tiny tile budget -> exercises HW tiling, the padded-tail
    #    masking of the max, and the broadcast-apply kernel.
    x2, w1b, b1b, w2b, b2b = make_inputs(k2, 2, 16, 12, 12)
    out2 = jax.block_until_ready(
        ca_forward(x2, w1b, b1b, w2b, b2b,
                   single_pass_max_bytes=0, hw_tile_target_bytes=8192))
    ref2 = ca_reference(x2, w1b, b1b, w2b, b2b)
    assert out2.shape == x2.shape
    assert jnp.allclose(out2, ref2, atol=1e-5, rtol=1e-5)

    print("KERNEL_OK")
</pallas_src>

<mosaic_0001>
module attributes {stable_mosaic.version = 11 : i64} {
  func.func @ca_fused_kernel(%arg0: i32, %arg1: memref<1x8x256xf32, #tpu.memory_space<vmem>>, %arg2: memref<4x8xf32, #tpu.memory_space<vmem>>, %arg3: memref<4x1xf32, #tpu.memory_space<vmem>>, %arg4: memref<8x4xf32, #tpu.memory_space<vmem>>, %arg5: memref<8x1xf32, #tpu.memory_space<vmem>>, %arg6: memref<1x8x256xf32, #tpu.memory_space<vmem>>) attributes {dimension_semantics = [#tpu.dimension_semantics<parallel>], iteration_bounds = array<i64: 2>, scalar_prefetch = 0 : i64, scratch_operands = 0 : i64, tpu.core_type = #tpu.core_type<tc>, window_params = [{transform_indices = @transform_0, window_bounds = array<i64: 1, 8, 256>}, {pipeline_mode = #tpu.pipeline_mode<synchronous>, transform_indices = @transform_1, window_bounds = array<i64: 4, 8>}, {pipeline_mode = #tpu.pipeline_mode<synchronous>, transform_indices = @transform_2, window_bounds = array<i64: 4, 1>}, {pipeline_mode = #tpu.pipeline_mode<synchronous>, transform_indices = @transform_3, window_bounds = array<i64: 8, 4>}, {pipeline_mode = #tpu.pipeline_mode<synchronous>, transform_indices = @transform_4, window_bounds = array<i64: 8, 1>}, {transform_indices = @transform_5, window_bounds = array<i64: 1, 8, 256>}]} {
    %c0 = arith.constant 0 : index
    %c0_0 = arith.constant 0 : index
    %c0_1 = arith.constant 0 : index
    %0 = vector.load %arg1[%c0, %c0_0, %c0_1] : memref<1x8x256xf32, #tpu.memory_space<vmem>>, vector<1x8x256xf32>
    %1 = vector.shape_cast %0 : vector<1x8x256xf32> to vector<8x256xf32>
    %cst = arith.constant dense<0.000000e+00> : vector<8xf32>
    %2 = vector.multi_reduction <add>, %1, %cst [1] : vector<8x256xf32> to vector<8xf32>
    %3 = vector.shape_cast %2 : vector<8xf32> to vector<8x1xf32>
    %cst_2 = arith.constant dense<0xFF800000> : vector<8xf32>
    %4 = vector.multi_reduction <maximumf>, %1, %cst_2 [1] : vector<8x256xf32> to vector<8xf32>
    %5 = vector.shape_cast %4 : vector<8xf32> to vector<8x1xf32>
    %cst_3 = arith.constant 3.906250e-03 : f32
    %6 = vector.broadcast %cst_3 : f32 to vector<8x1xf32>
    %7 = arith.mulf %3, %6 : vector<8x1xf32>
    %c0_4 = arith.constant 0 : index
    %c0_5 = arith.constant 0 : index
    %8 = vector.load %arg2[%c0_4, %c0_5] : memref<4x8xf32, #tpu.memory_space<vmem>>, vector<4x8xf32>
    %c0_6 = arith.constant 0 : index
    %c0_7 = arith.constant 0 : index
    %9 = vector.load %arg3[%c0_6, %c0_7] : memref<4x1xf32, #tpu.memory_space<vmem>>, vector<4x1xf32>
    %c0_8 = arith.constant 0 : index
    %c0_9 = arith.constant 0 : index
    %10 = vector.load %arg4[%c0_8, %c0_9] : memref<8x4xf32, #tpu.memory_space<vmem>>, vector<8x4xf32>
    %c0_10 = arith.constant 0 : index
    %c0_11 = arith.constant 0 : index
    %11 = vector.load %arg5[%c0_10, %c0_11] : memref<8x1xf32, #tpu.memory_space<vmem>>, vector<8x1xf32>
    %cst_12 = arith.constant dense<0.000000e+00> : vector<4x1xf32>
    %12 = tpu.matmul %8, %7, %cst_12 {dimension_numbers = #tpu.dot_dimension_numbers<[1], [0], [0], [1], [0, 0, 1, 1], [], []>} : vector<4x8xf32>, vector<8x1xf32>, vector<4x1xf32> -> vector<4x1xf32>
    %13 = arith.addf %12, %9 : vector<4x1xf32>
    %cst_13 = arith.constant 0.000000e+00 : f32
    %14 = vector.broadcast %cst_13 : f32 to vector<4x1xf32>
    %15 = arith.maximumf %13, %14 : vector<4x1xf32>
    %cst_14 = arith.constant dense<0.000000e+00> : vector<4x1xf32>
    %16 = tpu.matmul %8, %5, %cst_14 {dimension_numbers = #tpu.dot_dimension_numbers<[1], [0], [0], [1], [0, 0, 1, 1], [], []>} : vector<4x8xf32>, vector<8x1xf32>, vector<4x1xf32> -> vector<4x1xf32>
    %17 = arith.addf %16, %9 : vector<4x1xf32>
    %cst_15 = arith.constant 0.000000e+00 : f32
    %18 = vector.broadcast %cst_15 : f32 to vector<4x1xf32>
    %19 = arith.maximumf %17, %18 : vector<4x1xf32>
    %20 = arith.addf %15, %19 : vector<4x1xf32>
    %cst_16 = arith.constant dense<0.000000e+00> : vector<8x1xf32>
    %21 = tpu.matmul %10, %20, %cst_16 {dimension_numbers = #tpu.dot_dimension_numbers<[1], [0], [0], [1], [0, 0, 1, 1], [], []>} : vector<8x4xf32>, vector<4x1xf32>, vector<8x1xf32> -> vector<8x1xf32>
    %cst_17 = arith.constant 2.000000e+00 : f32
    %22 = vector.broadcast %cst_17 : f32 to vector<8x1xf32>
    %23 = arith.mulf %22, %11 : vector<8x1xf32>
    %24 = arith.addf %21, %23 : vector<8x1xf32>
    %25 = arith.negf %24 : vector<8x1xf32>
    %26 = math.exp %25 : vector<8x1xf32>
    %cst_18 = arith.constant 1.000000e+00 : f32
    %27 = vector.broadcast %cst_18 : f32 to vector<8x1xf32>
    %28 = arith.addf %27, %26 : vector<8x1xf32>
    %29 = arith.divf %27, %28 : vector<8x1xf32>
    %c0_19 = arith.constant 0 : index
    %c0_20 = arith.constant 0 : index
    %c0_21 = arith.constant 0 : index
    %30 = vector.load %arg1[%c0_19, %c0_20, %c0_21] : memref<1x8x256xf32, #tpu.memory_space<vmem>>, vector<1x8x256xf32>
    %31 = vector.shape_cast %30 : vector<1x8x256xf32> to vector<8x256xf32>
    %32 = vector.broadcast %29 : vector<8x1xf32> to vector<8x256xf32>
    %33 = arith.mulf %31, %32 : vector<8x256xf32>
    %c0_22 = arith.constant 0 : index
    %c0_23 = arith.constant 0 : index
    %c0_24 = arith.constant 0 : index
    %34 = vector.load %arg6[%c0_22, %c0_23, %c0_24] : memref<1x8x256xf32, #tpu.memory_space<vmem>>, vector<1x8x256xf32>
    %35 = vector.shape_cast %34 : vector<1x8x256xf32> to vector<8x256xf32>
    %36 = vector.shape_cast %33 : vector<8x256xf32> to vector<1x8x256xf32>
    tpu.vector_store %arg6[%c0_22, %c0_23, %c0_24], %36 {strides = array<i32>} : memref<1x8x256xf32, #tpu.memory_space<vmem>>, vector<1x8x256xf32>,
    return
  }
  func.func @transform_0(%arg0: i32) -> (i32, i32, i32) {
    %c0_i32 = arith.constant 0 : i32
    %c0_i32_0 = arith.constant 0 : i32
    %c0_i32_1 = arith.constant 0 : i32
    return %arg0, %c0_i32, %c0_i32_0 : i32, i32, i32
  }
  func.func @transform_1(%arg0: i32) -> (i32, i32) {
    %c0_i32 = arith.constant 0 : i32
    %c0_i32_0 = arith.constant 0 : i32
    %c0_i32_1 = arith.constant 0 : i32
    return %c0_i32, %c0_i32_0 : i32, i32
  }
  func.func @transform_2(%arg0: i32) -> (i32, i32) {
    %c0_i32 = arith.constant 0 : i32
    %c0_i32_0 = arith.constant 0 : i32
    %c0_i32_1 = arith.constant 0 : i32
    return %c0_i32, %c0_i32_0 : i32, i32
  }
  func.func @transform_3(%arg0: i32) -> (i32, i32) {
    %c0_i32 = arith.constant 0 : i32
    %c0_i32_0 = arith.constant 0 : i32
    %c0_i32_1 = arith.constant 0 : i32
    return %c0_i32, %c0_i32_0 : i32, i32
  }
  func.func @transform_4(%arg0: i32) -> (i32, i32) {
    %c0_i32 = arith.constant 0 : i32
    %c0_i32_0 = arith.constant 0 : i32
    %c0_i32_1 = arith.constant 0 : i32
    return %c0_i32, %c0_i32_0 : i32, i32
  }
  func.func @transform_5(%arg0: i32) -> (i32, i32, i32) {
    %c0_i32 = arith.constant 0 : i32
    %c0_i32_0 = arith.constant 0 : i32
    %c0_i32_1 = arith.constant 0 : i32
    return %arg0, %c0_i32, %c0_i32_0 : i32, i32, i32
  }
}

</mosaic_0001>

<llo_original>
// kernel: tpu_custom_call.1
$region0: #{tpu_custom_call.1}
  #allocation0 [shape = 'u32[]', space=smem, size = 0x4, offset = 0x4, fixed_abs, tag = 'smem constant byte address 0x4 - core index']
  #allocation1 [shape = 'u32[144,128]{1,0:T(1,128)}', space=vmem, size = 0x12000, scoped, tag = 'internal scratch']
  %s0 = inlined_call_operand.hbm [shape: f32[2,8,256], index: 0, kind: input, shape index: {}]
  %s1 = inlined_call_operand.vmem [shape: f32[4,8], index: 1, kind: input, shape index: {}]
  %s2 = inlined_call_operand.vmem [shape: f32[4,1], index: 2, kind: input, shape index: {}]
  %s3 = inlined_call_operand.vmem [shape: f32[8,4], index: 3, kind: input, shape index: {}]
  %s4 = inlined_call_operand.vmem [shape: f32[8,1], index: 4, kind: input, shape index: {}]
  %s5 = inlined_call_operand.hbm [shape: f32[2,8,256], index: 5, kind: output, shape index: {}]
  %s6 = sld [smem:[#allocation0]]
  $region57: #{tpu_custom_call.1} parent=0
    _
  %s8 = ssub.s32 1, %s6
  %s9 = scalar_select 0, %s8, %s6
  $region1: #{tpu_custom_call.1} parent=0
    #allocation2 [shape = 'u8[16384]{0}', space=vmem, size = 0x4000, scoped, tag = 'input window, operand 0']
    #allocation3 [shape = 's32[2]{0}', space=sflag, size = 0x8, scoped, tag = 'scoped memory for tpu_custom_call.1']
    #allocation4 [shape = 's32[2]{0}', space=sflag, size = 0x8, scoped, tag = 'scoped memory for tpu_custom_call.1']
    #allocation5 [shape = 'u8[16384]{0}', space=vmem, size = 0x4000, scoped, tag = 'output window, operand 0']
    %10 = vsyncpa [#allocation3], 0
    %s11 = scalar_lea.sflag [#allocation3], 1
    %12 = vsyncpa %s11, 0
    %13 = vsyncpa [#allocation4], 0
    %s14 = scalar_lea.sflag [#allocation4], 1
    %15 = vsyncpa %s14, 0
    loop: start=0, step=1, limit=4
    $region2: #{tpu_custom_call.1} parent=1 // loop_pre_header
      _
    $region3: #{tpu_custom_call.1} parent=1 // loop_header
      %s17 = sphi 0, %s21
      %p18 = scmp.ge.s32.totalorder %s17, 4
      %s27 = sphi 0, %s29
      %s30 = sphi 0, %s27
      %s31 = sphi 0, %s30
      %s47 = sphi 0, %s31
      %s51 = sphi 0, %s51
      %s53 = sphi 0, %s51
      %s54 = sphi 0, %s53
      %s68 = sphi 0, %s54
      %s72 = sphi 0, %s72
      %s74 = sphi 0, %s72
      %s75 = sphi 0, %s74
      %s89 = sphi 0, %s75
      %s93 = sphi 0, %s93
      %s95 = sphi 0, %s93
      %s96 = sphi 0, %s95
      %s110 = sphi 0, %s96
      %s114 = sphi 0, %s114
      %s116 = sphi 0, %s114
      %s117 = sphi 0, %s116
      %s131 = sphi 0, %s117
      %s137 = sphi 0, %s139
      %s140 = sphi 0, %s137
      %s141 = sphi 0, %s140
      %s157 = sphi 0, %s141
    $region4: #{tpu_custom_call.1} parent=1 // loop_header_branch
      %20 = sbr.rel (%p18) target = $region8
    $region5: #{tpu_custom_call.1} parent=1 // loop_body
      %s22 = ssub.s32 %s17, 1
      %s23 = ssub.s32 %s17, 2
      %s24 = sadd.s32 %s17, 1
      %s25 = ssub.s32 %s17, %s24
      %p26 = scmp.eq.s32.totalorder %s25, 0
      %s28 = sadd.s32 %s27, 1
      %s29 = scalar_select %p26, %s27, %s28
      %p32 = pneg %p26
      %p33 = scmp.eq.s32.totalorder %s17, 1
      %p34 = por %p32, %p33
      %p35 = scmp.ne.s32.totalorder %s27, %s30
      %p36 = scmp.eq.s32.totalorder %s17, 0
      %p37 = por %p35, %p36
      %p38 = scmp.ne.s32.totalorder %s27, %s30
      %p39 = scmp.eq.s32.totalorder %s22, 1
      %p40 = por %p38, %p39
      %p41 = scmp.ne.s32.totalorder %s30, %s31
      %p42 = scmp.eq.s32.totalorder %s22, 0
      %p43 = por %p41, %p42
      %p44 = scmp.ne.s32.totalorder %s30, %s31
      %p45 = scmp.eq.s32.totalorder %s23, 1
      %p46 = por %p44, %p45
      %p48 = scmp.ne.s32.totalorder %s31, %s47
      %p49 = scmp.eq.s32.totalorder %s23, 0
      %p50 = por %p48, %p49
      %s52 = sadd.s32 %s51, 1
      %p55 = scmp.eq.s32.totalorder %s17, 1
      %p56 = scmp.ne.s32.totalorder %s51, %s53
      %p57 = scmp.eq.s32.totalorder %s17, 0
      %p58 = por %p56, %p57
      %p59 = scmp.ne.s32.totalorder %s51, %s53
      %p60 = scmp.eq.s32.totalorder %s22, 1
      %p61 = por %p59, %p60
      %p62 = scmp.ne.s32.totalorder %s53, %s54
      %p63 = scmp.eq.s32.totalorder %s22, 0
      %p64 = por %p62, %p63
      %p65 = scmp.ne.s32.totalorder %s53, %s54
      %p66 = scmp.eq.s32.totalorder %s23, 1
      %p67 = por %p65, %p66
      %p69 = scmp.ne.s32.totalorder %s54, %s68
      %p70 = scmp.eq.s32.totalorder %s23, 0
      %p71 = por %p69, %p70
      %s73 = sadd.s32 %s72, 1
      %p76 = scmp.eq.s32.totalorder %s17, 1
      %p77 = scmp.ne.s32.totalorder %s72, %s74
      %p78 = scmp.eq.s32.totalorder %s17, 0
      %p79 = por %p77, %p78
      %p80 = scmp.ne.s32.totalorder %s72, %s74
      %p81 = scmp.eq.s32.totalorder %s22, 1
      %p82 = por %p80, %p81
      %p83 = scmp.ne.s32.totalorder %s74, %s75
      %p84 = scmp.eq.s32.totalorder %s22, 0
      %p85 = por %p83, %p84
      %p86 = scmp.ne.s32.totalorder %s74, %s75
      %p87 = scmp.eq.s32.totalorder %s23, 1
      %p88 = por %p86, %p87
      %p90 = scmp.ne.s32.totalorder %s75, %s89
      %p91 = scmp.eq.s32.totalorder %s23, 0
      %p92 = por %p90, %p91
      %s94 = sadd.s32 %s93, 1
      %p97 = scmp.eq.s32.totalorder %s17, 1
      %p98 = scmp.ne.s32.totalorder %s93, %s95
      %p99 = scmp.eq.s32.totalorder %s17, 0
      %p100 = por %p98, %p99
      %p101 = scmp.ne.s32.totalorder %s93, %s95
      %p102 = scmp.eq.s32.totalorder %s22, 1
      %p103 = por %p101, %p102
      %p104 = scmp.ne.s32.totalorder %s95, %s96
      %p105 = scmp.eq.s32.totalorder %s22, 0
      %p106 = por %p104, %p105
      %p107 = scmp.ne.s32.totalorder %s95, %s96
      %p108 = scmp.eq.s32.totalorder %s23, 1
      %p109 = por %p107, %p108
      %p111 = scmp.ne.s32.totalorder %s96, %s110
      %p112 = scmp.eq.s32.totalorder %s23, 0
      %p113 = por %p111, %p112
      %s115 = sadd.s32 %s114, 1
      %p118 = scmp.eq.s32.totalorder %s17, 1
      %p119 = scmp.ne.s32.totalorder %s114, %s116
      %p120 = scmp.eq.s32.totalorder %s17, 0
      %p121 = por %p119, %p120
      %p122 = scmp.ne.s32.totalorder %s114, %s116
      %p123 = scmp.eq.s32.totalorder %s22, 1
      %p124 = por %p122, %p123
      %p125 = scmp.ne.s32.totalorder %s116, %s117
      %p126 = scmp.eq.s32.totalorder %s22, 0
      %p127 = por %p125, %p126
      %p128 = scmp.ne.s32.totalorder %s116, %s117
      %p129 = scmp.eq.s32.totalorder %s23, 1
      %p130 = por %p128, %p129
      %p132 = scmp.ne.s32.totalorder %s117, %s131
      %p133 = scmp.eq.s32.totalorder %s23, 0
      %p134 = por %p132, %p133
      %s135 = ssub.s32 %s17, %s24
      %p136 = scmp.eq.s32.totalorder %s135, 0
      %s138 = sadd.s32 %s137, 1
      %s139 = scalar_select %p136, %s137, %s138
      %p142 = pneg %p136
      %p143 = scmp.eq.s32.totalorder %s17, 1
      %p144 = por %p142, %p143
      %p145 = scmp.ne.s32.totalorder %s137, %s140
      %p146 = scmp.eq.s32.totalorder %s17, 0
      %p147 = por %p145, %p146
      %p148 = scmp.ne.s32.totalorder %s137, %s140
      %p149 = scmp.eq.s32.totalorder %s22, 1
      %p150 = por %p148, %p149
      %p151 = scmp.ne.s32.totalorder %s140, %s141
      %p152 = scmp.eq.s32.totalorder %s22, 0
      %p153 = por %p151, %p152
      %p154 = scmp.ne.s32.totalorder %s140, %s141
      %p155 = scmp.eq.s32.totalorder %s23, 1
      %p156 = por %p154, %p155
      %p158 = scmp.ne.s32.totalorder %s141, %s157
      %p159 = scmp.eq.s32.totalorder %s23, 0
      %p160 = por %p158, %p159
      %p161 = scmp.le.s32.totalorder 1, %s17
      %p162 = scmp.lt.s32.totalorder %s17, 3
      %p163 = pnand %p161, %p162
      %p164 = pneg %p163
      // Predicated region
      $region9: #{tpu_custom_call.1} parent=5 // pred_check
        _
      $region10: #{tpu_custom_call.1} parent=5 // pred_check_branch
        %166 = sbr.rel (%p163) target = $region12
      $region11: #{tpu_custom_call.1} parent=5 // pred_region
        %s167 = ssub.s32 %s17, 1
        // Predicated region
        $region13: #{tpu_custom_call.1} parent=11 // pred_check
          %p168 = pneg %p64
        $region14: #{tpu_custom_call.1} parent=11 // pred_check_branch
          %170 = sbr.rel (%p168) target = $region16
        $region15: #{tpu_custom_call.1} parent=11 // pred_region
          _
        $region16: #{tpu_custom_call.1} parent=11 // pred_fallthru
          _
        // Predicated region
        $region17: #{tpu_custom_call.1} parent=11 // pred_check
          %p171 = pneg %p85
        $region18: #{tpu_custom_call.1} parent=11 // pred_check_branch
          %173 = sbr.rel (%p171) target = $region20
        $region19: #{tpu_custom_call.1} parent=11 // pred_region
          _
        $region20: #{tpu_custom_call.1} parent=11 // pred_fallthru
          _
        // Predicated region
        $region21: #{tpu_custom_call.1} parent=11 // pred_check
          %p174 = pneg %p106
        $region22: #{tpu_custom_call.1} parent=11 // pred_check_branch
          %176 = sbr.rel (%p174) target = $region24
        $region23: #{tpu_custom_call.1} parent=11 // pred_region
          _
        $region24: #{tpu_custom_call.1} parent=11 // pred_fallthru
          _
        // Predicated region
        $region25: #{tpu_custom_call.1} parent=11 // pred_check
          %p177 = pneg %p127
        $region26: #{tpu_custom_call.1} parent=11 // pred_check_branch
          %179 = sbr.rel (%p177) target = $region28
        $region27: #{tpu_custom_call.1} parent=11 // pred_region
          _
        $region28: #{tpu_custom_call.1} parent=11 // pred_fallthru
          _
      $region12: #{tpu_custom_call.1} parent=5 // pred_fallthru
        _
      %p180 = scmp.lt.s32.totalorder %s17, 2
      // Predicated region
      $region29: #{tpu_custom_call.1} parent=5 // pred_check
        %p181 = pneg %p180
      $region30: #{tpu_custom_call.1} parent=5 // pred_check_branch
        %183 = sbr.rel (%p181) target = $region32
      $region31: #{tpu_custom_call.1} parent=5 // pred_region
        // Predicated region
        $region33: #{tpu_custom_call.1} parent=31 // pred_check
          %p184 = pneg %p37
        $region34: #{tpu_custom_call.1} parent=31 // pred_check_branch
          %186 = sbr.rel (%p184) target = $region36
        $region35: #{tpu_custom_call.1} parent=31 // pred_region
          %s187 = sand.u32 %s27, 1
          %s188 = scalar_lea.sflag [#allocation3], %s187
          %s189 = sand.u32 %s27, 1
          %s190 = smul.addr %s189, 16
          %s191 = scalar_lea.vmem [#allocation2], %s190
          %s193 = ssub.s32 256, 256
          %194 = vsyncadd %s188, %s193
          %s195 = smul.addr %s17, 2
          %s196 = smul.addr %s195, 128
          %s197 = scalar_lea.hbm %s0, %s196
          %s199 = sshll.u32 %s191, 4
          %s200 = int_to_ptr.vmem [resolvable:$true] %s199
          %202 = dma.hbm_to_vmem [thread:$0]  %s197, 256, %s200, %s188
        $region36: #{tpu_custom_call.1} parent=31 // pred_fallthru
          _
      $region32: #{tpu_custom_call.1} parent=5 // pred_fallthru
        _
      %p203 = scmp.le.s32.totalorder 1, %s17
      %p204 = scmp.lt.s32.totalorder %s17, 3
      %p205 = pnand %p203, %p204
      %p206 = pneg %p205
      // Predicated region
      $region37: #{tpu_custom_call.1} parent=5 // pred_check
        _
      $region38: #{tpu_custom_call.1} parent=5 // pred_check_branch
        %208 = sbr.rel (%p205) target = $region40
      $region39: #{tpu_custom_call.1} parent=5 // pred_region
        %s209 = ssub.s32 %s17, 1
        %s210 = sand.u32 %s30, 1
        %s211 = scalar_lea.sflag [#allocation3], %s210
        %s212 = sand.u32 %s30, 1
        %s213 = smul.addr %s212, 16
        %s214 = scalar_lea.vmem [#allocation2], %s213
        // Predicated region
        $region41: #{tpu_custom_call.1} parent=39 // pred_check
          %p215 = pneg %p43
        $region42: #{tpu_custom_call.1} parent=39 // pred_check_branch
          %217 = sbr.rel (%p215) target = $region44
        $region43: #{tpu_custom_call.1} parent=39 // pred_region
          %218 = dma.done %s211, 256
        $region44: #{tpu_custom_call.1} parent=39 // pred_fallthru
          _
        %s219 = sand.u32 %s30, 1
        %s220 = scalar_lea.sflag [#allocation3], %s219
        %s221 = sand.u32 %s30, 1
        %s222 = smul.addr %s221, 16
        %s223 = scalar_lea.vmem [#allocation2], %s222
        %p224 = pneg %p43
        %p225 = pneg %p40
        %p226 = pneg %p64
        %p227 = pneg %p61
        %p228 = pneg %p85
        %p229 = pneg %p82
        %p230 = pneg %p106
        %p231 = pneg %p103
        %p232 = pneg %p127
        %p233 = pneg %p124
        %p234 = pneg %p153
        %p235 = pneg %p150
        %s236 = sand.u32 %s140, 1
        %s237 = scalar_lea.sflag [#allocation4], %s236
        %s238 = sand.u32 %s140, 1
        %s239 = smul.addr %s238, 16
        %s240 = scalar_lea.vmem [#allocation5], %s239
        %v241 = vld [vmem:[%s214] sm:$0xff]
        %v242 = vld [vmem:[%s214 + $0x8] sm:$0xff]
        %v243 = vadd.f32 %v241, %v242
        %244 = vadd.xlane.f32.xlu0 %v243
        %v245 = vpop.xlane.xlu0 %244
        %v246 = vmax.f32 %v241, %v242
        %247 = vmax.xlane.f32.xlu0 %v246
        %v248 = vpop.xlane.xlu0 %247
        %v249 = vmul.f32 %v245, 0.00390625
        %v250 = vld [vmem:[%s1] sm:$0xf]
        %v251 = vld [vmem:[%s2] sm:$0xf]
        %v252 = vld [vmem:[%s3] sm:$0xff]
        %v253 = vld [vmem:[%s4] sm:$0xff]
        %vm254 = vcmask 64512
        %v256 = vsel %vm254, %v250, 0
        %258 = vmatprep.subr.mxu0 0.0
        %259 = vmatpush1.msra.mxu0 %v249
        %260 = vmatprep.subr.mxu0 0.0
        %261 = vmatpush1.msra.mxu0 0.0
        %262 = vmatprep.subr.mxu0 0.0
        %263 = vmatpush1.msra.mxu0 0.0
        %264 = vmatprep.subr.mxu0 0.0
        %265 = vmatpush1.msra.mxu0 0.0
        %266 = vmatprep.subr.mxu0 0.0
        %267 = vmatpush1.msra.mxu0 0.0
        %268 = vmatprep.subr.mxu0 0.0
        %269 = vmatpush1.msra.mxu0 0.0
        %270 = vmatprep.subr.mxu0 0.0
        %271 = vmatpush1.msra.mxu0 0.0
        %272 = vmatprep.subr.mxu0 0.0
        %273 = vmatpush1.msra.mxu0 0.0
        %274 = vmatprep.subr.mxu0 0.0
        %275 = vmatpush1.msra.mxu0 0.0
        %276 = vmatprep.subr.mxu0 0.0
        %277 = vmatpush1.msra.mxu0 0.0
        %278 = vmatprep.subr.mxu0 0.0
        %279 = vmatpush1.msra.mxu0 0.0
        %280 = vmatprep.subr.mxu0 0.0
        %281 = vmatpush1.msra.mxu0 0.0
        %282 = vmatprep.subr.mxu0 0.0
        %283 = vmatpush1.msra.mxu0 0.0
        %284 = vmatprep.subr.mxu0 0.0
        %285 = vmatpush1.msra.mxu0 0.0
        %286 = vmatprep.subr.mxu0 0.0
        %287 = vmatpush1.msra.mxu0 0.0
        %288 = vmatprep.subr.mxu0 0.0
        %289 = vmatpush1.msra.mxu0 0.0
        %290 = vmatprep.subr.mxu0 0.0
        %291 = vmatpush1.msra.mxu0 0.0
        %292 = vmatprep.subr.mxu0 0.0
        %293 = vmatpush1.msra.mxu0 0.0
        %294 = vmatprep.subr.mxu0 0.0
        %295 = vmatpush1.msra.mxu0 0.0
        %296 = vmatprep.subr.mxu0 0.0
        %297 = vmatpush1.msra.mxu0 0.0
        %298 = vmatprep.subr.mxu0 0.0
        %299 = vmatpush1.msra.mxu0 0.0
        %300 = vmatprep.subr.mxu0 0.0
        %301 = vmatpush1.msra.mxu0 0.0
        %302 = vmatprep.subr.mxu0 0.0
        %303 = vmatpush1.msra.mxu0 0.0
        %304 = vmatprep.subr.mxu0 0.0
        %305 = vmatpush1.msra.mxu0 0.0
        %306 = vmatprep.subr.mxu0 0.0
        %307 = vmatpush1.msra.mxu0 0.0
        %308 = vmatprep.subr.mxu0 0.0
        %309 = vmatpush1.msra.mxu0 0.0
        %310 = vmatprep.subr.mxu0 0.0
        %311 = vmatpush1.msra.mxu0 0.0
        %312 = vmatprep.subr.mxu0 0.0
        %313 = vmatpush1.msra.mxu0 0.0
        %314 = vmatprep.subr.mxu0 0.0
        %315 = vmatpush1.msra.mxu0 0.0
        %316 = vmatprep.subr.mxu0 0.0
        %317 = vmatpush1.msra.mxu0 0.0
        %318 = vmatprep.subr.mxu0 0.0
        %319 = vmatpush1.msra.mxu0 0.0
        %320 = vmatprep.subr.mxu0 0.0
        %321 = vmatpush1.msra.mxu0 0.0
        %322 = vmatprep.mubr.f32.mxu0 0.0
        %323 = vmatmul.mubr.f32.gmra.mrb[0].mxu0 %v256
        %v324 = vpop.f32.mrb[0].mxu0
        %v325 = vadd.f32 %v251, %v324
        %v326 = vpop.f32.mrb[0].mxu0
        %327 = vdwg.mxu0
        %v328 = vmax.f32 %v325, 0.0
        %329 = vmatprep.subr.mxu0 0.0
        %330 = vmatpush1.msra.mxu0 %v248
        %331 = vmatprep.subr.mxu0 0.0
        %332 = vmatpush1.msra.mxu0 0.0
        %333 = vmatprep.subr.mxu0 0.0
        %334 = vmatpush1.msra.mxu0 0.0
        %335 = vmatprep.subr.mxu0 0.0
        %336 = vmatpush1.msra.mxu0 0.0
        %337 = vmatprep.subr.mxu0 0.0
        %338 = vmatpush1.msra.mxu0 0.0
        %339 = vmatprep.subr.mxu0 0.0
        %340 = vmatpush1.msra.mxu0 0.0
        %341 = vmatprep.subr.mxu0 0.0
        %342 = vmatpush1.msra.mxu0 0.0
        %343 = vmatprep.subr.mxu0 0.0
        %344 = vmatpush1.msra.mxu0 0.0
        %345 = vmatprep.subr.mxu0 0.0
        %346 = vmatpush1.msra.mxu0 0.0
        %347 = vmatprep.subr.mxu0 0.0
        %348 = vmatpush1.msra.mxu0 0.0
        %349 = vmatprep.subr.mxu0 0.0
        %350 = vmatpush1.msra.mxu0 0.0
        %351 = vmatprep.subr.mxu0 0.0
        %352 = vmatpush1.msra.mxu0 0.0
        %353 = vmatprep.subr.mxu0 0.0
        %354 = vmatpush1.msra.mxu0 0.0
        %355 = vmatprep.subr.mxu0 0.0
        %356 = vmatpush1.msra.mxu0 0.0
        %357 = vmatprep.subr.mxu0 0.0
        %358 = vmatpush1.msra.mxu0 0.0
        %359 = vmatprep.subr.mxu0 0.0
        %360 = vmatpush1.msra.mxu0 0.0
        %361 = vmatprep.subr.mxu0 0.0
        %362 = vmatpush1.msra.mxu0 0.0
        %363 = vmatprep.subr.mxu0 0.0
        %364 = vmatpush1.msra.mxu0 0.0
        %365 = vmatprep.subr.mxu0 0.0
        %366 = vmatpush1.msra.mxu0 0.0
        %367 = vmatprep.subr.mxu0 0.0
        %368 = vmatpush1.msra.mxu0 0.0
        %369 = vmatprep.subr.mxu0 0.0
        %370 = vmatpush1.msra.mxu0 0.0
        %371 = vmatprep.subr.mxu0 0.0
        %372 = vmatpush1.msra.mxu0 0.0
        %373 = vmatprep.subr.mxu0 0.0
        %374 = vmatpush1.msra.mxu0 0.0
        %375 = vmatprep.subr.mxu0 0.0
        %376 = vmatpush1.msra.mxu0 0.0
        %377 = vmatprep.subr.mxu0 0.0
        %378 = vmatpush1.msra.mxu0 0.0
        %379 = vmatprep.subr.mxu0 0.0
        %380 = vmatpush1.msra.mxu0 0.0
        %381 = vmatprep.subr.mxu0 0.0
        %382 = vmatpush1.msra.mxu0 0.0
        %383 = vmatprep.subr.mxu0 0.0
        %384 = vmatpush1.msra.mxu0 0.0
        %385 = vmatprep.subr.mxu0 0.0
        %386 = vmatpush1.msra.mxu0 0.0
        %387 = vmatprep.subr.mxu0 0.0
        %388 = vmatpush1.msra.mxu0 0.0
        %389 = vmatprep.subr.mxu0 0.0
        %390 = vmatpush1.msra.mxu0 0.0
        %391 = vmatprep.subr.mxu0 0.0
        %392 = vmatpush1.msra.mxu0 0.0
        %393 = vmatprep.mubr.f32.mxu0 0.0
        %394 = vmatmul.mubr.f32.gmra.mrb[0].mxu0 %v256
        %v395 = vpop.f32.mrb[0].mxu0
        %v396 = vadd.f32 %v251, %v395
        %v397 = vpop.f32.mrb[0].mxu0
        %398 = vdwg.mxu0
        %v399 = vmax.f32 %v396, 0.0
        %v400 = vadd.f32 %v328, %v399
        %v401 = vmul.f32 %v253, 2.0
        %vm402 = vcmask 31744
        %v404 = vsel %vm402, %v252, 0
        %vm406 = vcmask 1043456
        %v408 = vsel %vm406, %v400, 0
        %410 = vmatprep.subr.mxu0 0.0
        %411 = vmatpush1.msra.mxu0 %v408
        %412 = vmatprep.subr.mxu0 0.0
        %413 = vmatpush1.msra.mxu0 0.0
        %414 = vmatprep.subr.mxu0 0.0
        %415 = vmatpush1.msra.mxu0 0.0
        %416 = vmatprep.subr.mxu0 0.0
        %417 = vmatpush1.msra.mxu0 0.0
        %418 = vmatprep.subr.mxu0 0.0
        %419 = vmatpush1.msra.mxu0 0.0
        %420 = vmatprep.subr.mxu0 0.0
        %421 = vmatpush1.msra.mxu0 0.0
        %422 = vmatprep.subr.mxu0 0.0
        %423 = vmatpush1.msra.mxu0 0.0
        %424 = vmatprep.subr.mxu0 0.0
        %425 = vmatpush1.msra.mxu0 0.0
        %426 = vmatprep.subr.mxu0 0.0
        %427 = vmatpush1.msra.mxu0 0.0
        %428 = vmatprep.subr.mxu0 0.0
        %429 = vmatpush1.msra.mxu0 0.0
        %430 = vmatprep.subr.mxu0 0.0
        %431 = vmatpush1.msra.mxu0 0.0
        %432 = vmatprep.subr.mxu0 0.0
        %433 = vmatpush1.msra.mxu0 0.0
        %434 = vmatprep.subr.mxu0 0.0
        %435 = vmatpush1.msra.mxu0 0.0
        %436 = vmatprep.subr.mxu0 0.0
        %437 = vmatpush1.msra.mxu0 0.0
        %438 = vmatprep.subr.mxu0 0.0
        %439 = vmatpush1.msra.mxu0 0.0
        %440 = vmatprep.subr.mxu0 0.0
        %441 = vmatpush1.msra.mxu0 0.0
        %442 = vmatprep.subr.mxu0 0.0
        %443 = vmatpush1.msra.mxu0 0.0
        %444 = vmatprep.subr.mxu0 0.0
        %445 = vmatpush1.msra.mxu0 0.0
        %446 = vmatprep.subr.mxu0 0.0
        %447 = vmatpush1.msra.mxu0 0.0
        %448 = vmatprep.subr.mxu0 0.0
        %449 = vmatpush1.msra.mxu0 0.0
        %450 = vmatprep.subr.mxu0 0.0
        %451 = vmatpush1.msra.mxu0 0.0
        %452 = vmatprep.subr.mxu0 0.0
        %453 = vmatpush1.msra.mxu0 0.0
        %454 = vmatprep.subr.mxu0 0.0
        %455 = vmatpush1.msra.mxu0 0.0
        %456 = vmatprep.subr.mxu0 0.0
        %457 = vmatpush1.msra.mxu0 0.0
        %458 = vmatprep.subr.mxu0 0.0
        %459 = vmatpush1.msra.mxu0 0.0
        %460 = vmatprep.subr.mxu0 0.0
        %461 = vmatpush1.msra.mxu0 0.0
        %462 = vmatprep.subr.mxu0 0.0
        %463 = vmatpush1.msra.mxu0 0.0
        %464 = vmatprep.subr.mxu0 0.0
        %465 = vmatpush1.msra.mxu0 0.0
        %466 = vmatprep.subr.mxu0 0.0
        %467 = vmatpush1.msra.mxu0 0.0
        %468 = vmatprep.subr.mxu0 0.0
        %469 = vmatpush1.msra.mxu0 0.0
        %470 = vmatprep.subr.mxu0 0.0
        %471 = vmatpush1.msra.mxu0 0.0
        %472 = vmatprep.subr.mxu0 0.0
        %473 = vmatpush1.msra.mxu0 0.0
        %474 = vmatprep.mubr.f32.mxu0 0.0
        %475 = vmatmul.mubr.f32.gmra.mrb[0].mxu0 %v404
        %v476 = vpop.f32.mrb[0].mxu0
        %v477 = vadd.f32 %v401, %v476
        %v478 = vpop.f32.mrb[0].mxu0
        %479 = vdwg.mxu0
        %v480 = vxor.u32 %v477, 2147483648
        %v481 = vmul.f32 %v480, 1.442695
        %v482 = vpow.pop %v481
        %v483 = vadd.f32 %v482, 1.0
        %v484 = vrcp.pop %v483
        %v485 = vmul.f32 1.0, %v484
        %487 = vset.pattern.permute.xlu0 0
        %488 = vperm.xlu0 %487, %v485
        %v489 = vpop.permute.xlu0 %488
        %v491 = vmul.f32 %v241, %v489
        %v492 = vmul.f32 %v242, %v489
        %493 = vst [vmem:[%s240] sm:$0xff] %v491
        %494 = vst [vmem:[%s240 + $0x8] sm:$0xff] %v492
        %s495 = sand.u32 %s140, 1
        %s496 = scalar_lea.sflag [#allocation4], %s495
        %s497 = sand.u32 %s140, 1
        %s498 = smul.addr %s497, 16
        %s499 = scalar_lea.vmem [#allocation5], %s498
        // Predicated region
        $region45: #{tpu_custom_call.1} parent=39 // pred_check
          %p500 = pneg %p150
        $region46: #{tpu_custom_call.1} parent=39 // pred_check_branch
          %502 = sbr.rel (%p500) target = $region48
        $region47: #{tpu_custom_call.1} parent=39 // pred_region
          %s504 = ssub.s32 256, 256
          %505 = vsyncadd %s496, %s504
          %s506 = smul.addr %s22, 2
          %s507 = smul.addr %s506, 128
          %s508 = scalar_lea.hbm %s5, %s507
          %s510 = sshll.u32 %s499, 4
          %s511 = int_to_ptr.vmem [resolvable:$true] %s510
          %513 = dma.vmem_to_hbm [thread:$0]  %s511, 256, %s508, %s496
        $region48: #{tpu_custom_call.1} parent=39 // pred_fallthru
          _
      $region40: #{tpu_custom_call.1} parent=5 // pred_fallthru
        _
      %p514 = scmp.le.s32.totalorder 2, %s17
      // Predicated region
      $region49: #{tpu_custom_call.1} parent=5 // pred_check
        %p515 = pneg %p514
      $region50: #{tpu_custom_call.1} parent=5 // pred_check_branch
        %517 = sbr.rel (%p515) target = $region52
      $region51: #{tpu_custom_call.1} parent=5 // pred_region
        %s518 = ssub.s32 %s17, 2
        // Predicated region
        $region53: #{tpu_custom_call.1} parent=51 // pred_check
          %p519 = pneg %p156
        $region54: #{tpu_custom_call.1} parent=51 // pred_check_branch
          %521 = sbr.rel (%p519) target = $region56
        $region55: #{tpu_custom_call.1} parent=51 // pred_region
          %s522 = sand.u32 %s141, 1
          %s523 = scalar_lea.sflag [#allocation4], %s522
          %s524 = sand.u32 %s141, 1
          %s525 = smul.addr %s524, 16
          %s526 = scalar_lea.vmem [#allocation5], %s525
          %527 = dma.done %s523, 256
        $region56: #{tpu_custom_call.1} parent=51 // pred_fallthru
          _
      $region52: #{tpu_custom_call.1} parent=5 // pred_fallthru
        _
    $region6: #{tpu_custom_call.1} parent=1 // loop_footer
      %s21 = sadd.s32 1, %s17
    $region7: #{tpu_custom_call.1} parent=1 // loop_footer_branch
      %16 = sbr.rel target = $region3
    $region8: #{tpu_custom_call.1} parent=1 // loop_exit
      _
    %528 = vsyncpa [#allocation3], 1
    %s529 = scalar_lea.sflag [#allocation3], 1
    %530 = vsyncpa %s529, 1
    %531 = vsyncpa [#allocation4], 1
    %s532 = scalar_lea.sflag [#allocation4], 1
    %533 = vsyncpa %s532, 1

</llo_original>
